<compile_context>
chip_gen: v7x
topology: tpu7x:2x2x1
jax: 0.10.0
libtpu: 0.0.40
codegen_flags: <defaults>
</compile_context>

<pallas_src>
import functools

import jax
import jax.numpy as jnp
from jax.experimental import pallas as pl
from jax.experimental.pallas import tpu as pltpu

LANE = 128
HIDDEN = 64


def _round_up(x, m):
    return (x + m - 1) // m * m


# --------------------------------- kernels -----------------------------------


def dueling_head_kernel(x_ref, w1_ref, b1_ref, wh_ref, bh_ref, w2_ref, b2_ref,
                        head_ref):
    """Trunk + fused branches -> lane-dense head tile.

    head[:, :A]   = adv  (a_net output)
    head[:, A]    = val  (v_net output)
    head[:, A+1:] = 0
    """
    x = x_ref[...]
    # shared trunk: f = relu(x @ W1 + b1)                               (TB, 64)
    f = jnp.maximum(
        jnp.dot(x, w1_ref[...], preferred_element_type=jnp.float32) + b1_ref[...],
        0.0,
    )
    # both branch hidden layers in ONE 128-lane matmul                  (TB, 128)
    h = jnp.maximum(
        jnp.dot(f, wh_ref[...], preferred_element_type=jnp.float32) + bh_ref[...],
        0.0,
    )
    # fused block-diagonal head: one matmul -> [adv | val | 0]          (TB, 128)
    head_ref[...] = (
        jnp.dot(h, w2_ref[...], preferred_element_type=jnp.float32) + b2_ref[...]
    )


def dueling_combine_kernel(head_ref, mean_ref, q_ref, *, n_actions):
    """q = val + (adv - mean(adv)); computed lane-dense, sliced by the wrapper."""
    head = head_ref[...]                        # (TB, 128)
    adv_mean = mean_ref[0, 0]                   # global scalar mean (SMEM)
    val = head[:, n_actions:n_actions + 1]      # (TB, 1), broadcast over lanes
    # lanes < n_actions hold adv -> val + adv - mean; other lanes are sliced away
    q_ref[...] = val + head - adv_mean


# --------------------------------- wrapper ------------------------------------


def fuse_params(params):
    """Fuse the five PyTorch Linear layers into lane-friendly weights (do once)."""
    (w1, b1, wa1, ba1, wa2, ba2, wv1, bv1, wv2, bv2) = params
    h = wa1.shape[0]
    n_actions = wa2.shape[1]
    lanes = max(LANE, _round_up(n_actions + 1, LANE))

    # hidden layers of both branches side by side -> (64, 128)
    wh = jnp.concatenate([wa1, wv1], axis=1)
    bh = jnp.concatenate([ba1, bv1], axis=1)

    # block-diagonal head -> (128, lanes): [:, :A] = adv head, [:, A] = val head
    w2 = jnp.zeros((2 * h, lanes), jnp.float32)
    w2 = w2.at[:h, :n_actions].set(wa2)
    w2 = w2.at[h:, n_actions:n_actions + 1].set(wv2)
    b2 = jnp.zeros((1, lanes), jnp.float32)
    b2 = b2.at[:, :n_actions].set(ba2)
    b2 = b2.at[:, n_actions:n_actions + 1].set(bv2)

    return (w1, b1, wh, bh, w2, b2), n_actions


def dueling_dqn_forward(x, fused_params, n_actions, *, block_b=512):
    w1, b1, wh, bh, w2, b2 = fused_params
    b_actual, n_states = x.shape
    hidden = wh.shape[0]
    lanes = w2.shape[1]

    # batch tiling: TB multiple of 8, batch padded to a multiple of TB
    tb = min(block_b, _round_up(b_actual, 8))
    b_pad = _round_up(b_actual, tb)
    if b_pad != b_actual:
        x = jnp.pad(x, ((0, b_pad - b_actual), (0, 0)))
    grid = (b_pad // tb,)

    tile = lambda shape: pl.BlockSpec(shape, lambda i: (i, 0))       # batch-tiled
    resident = lambda shape: pl.BlockSpec(shape, lambda i: (0, 0))   # VMEM-resident

    bytes_w = 4 * (w1.size + b1.size + wh.size + bh.size + w2.size + b2.size)

    # ---- pass 1: trunk + fused branches -> lane-dense head -------------------
    head = pl.pallas_call(
        dueling_head_kernel,
        out_shape=jax.ShapeDtypeStruct((b_pad, lanes), jnp.float32),
        grid_spec=pl.GridSpec(
            grid=grid,
            in_specs=[
                tile((tb, n_states)),
                resident((n_states, hidden)),
                resident((1, hidden)),
                resident((hidden, 2 * hidden)),
                resident((1, 2 * hidden)),
                resident((2 * hidden, lanes)),
                resident((1, lanes)),
            ],
            out_specs=tile((tb, lanes)),
        ),
        compiler_params=pltpu.CompilerParams(
            dimension_semantics=("parallel",)),
        cost_estimate=pl.CostEstimate(
            flops=2 * b_pad * (n_states * hidden
                               + hidden * 2 * hidden
                               + 2 * hidden * lanes),
            transcendentals=0,
            bytes_accessed=4 * (b_pad * n_states + b_pad * lanes) + bytes_w,
        ),
    )(x, w1, b1, wh, bh, w2, b2)

    # ---- global mean over adv (batch AND actions) == torch.mean(adv) ---------
    # Excludes batch-padding rows and the val / zero lanes.
    adv_mean = jnp.mean(head[:b_actual, :n_actions]).reshape(1, 1)

    # ---- pass 2: dueling combine (scalar mean in SMEM) ------------------------
    q_pad = pl.pallas_call(
        functools.partial(dueling_combine_kernel, n_actions=n_actions),
        out_shape=jax.ShapeDtypeStruct((b_pad, lanes), jnp.float32),
        grid_spec=pl.GridSpec(
            grid=grid,
            in_specs=[
                tile((tb, lanes)),
                pl.BlockSpec((1, 1), lambda i: (0, 0),
                             memory_space=pltpu.MemorySpace.SMEM),
            ],
            out_specs=tile((tb, lanes)),
        ),
        compiler_params=pltpu.CompilerParams(
            dimension_semantics=("parallel",)),
        cost_estimate=pl.CostEstimate(
            flops=2 * b_pad * lanes,
            transcendentals=0,
            bytes_accessed=4 * (2 * b_pad * lanes + 1),
        ),
    )(head, adv_mean)

    return q_pad[:b_actual, :n_actions]


# ------------------------------ init / reference ------------------------------


def init_params(key, n_states, n_actions, hidden=HIDDEN):
    """PyTorch-style init U(-1/sqrt(fan_in), 1/sqrt(fan_in)); weights stored (in, out)."""
    def linear(key, fan_in, fan_out):
        kw, kb = jax.random.split(key)
        bound = 1.0 / jnp.sqrt(jnp.float32(fan_in))
        w = jax.random.uniform(kw, (fan_in, fan_out), jnp.float32, -bound, bound)
        b = jax.random.uniform(kb, (1, fan_out), jnp.float32, -bound, bound)
        return w, b

    keys = jax.random.split(key, 5)
    w1, b1 = linear(keys[0], n_states, hidden)
    wa1, ba1 = linear(keys[1], hidden, hidden)
    wa2, ba2 = linear(keys[2], hidden, n_actions)
    wv1, bv1 = linear(keys[3], hidden, hidden)
    wv2, bv2 = linear(keys[4], hidden, 1)
    return (w1, b1, wa1, ba1, wa2, ba2, wv1, bv1, wv2, bv2)


def reference_forward(x, params):
    """Pure-JAX reference mirroring the PyTorch forward."""
    (w1, b1, wa1, ba1, wa2, ba2, wv1, bv1, wv2, bv2) = params
    f = jnp.maximum(x @ w1 + b1, 0.0)
    adv = jnp.maximum(f @ wa1 + ba1, 0.0) @ wa2 + ba2
    val = jnp.maximum(f @ wv1 + bv1, 0.0) @ wv2 + bv2
    return val + (adv - jnp.mean(adv))


if __name__ == "__main__":
    n_states = 16
    n_actions = 4
    batch = 2

    key = jax.random.PRNGKey(0)
    k_x, k_p = jax.random.split(key)
    x = jax.random.normal(k_x, (batch, n_states), dtype=jnp.float32)
    params = init_params(k_p, n_states, n_actions)
    fused, n_act = fuse_params(params)

    q = dueling_dqn_forward(x, fused, n_act)
    q = jax.block_until_ready(q)

    q_ref = reference_forward(x, params)
    assert q.shape == (batch, n_actions), q.shape
    assert jnp.allclose(q, q_ref, atol=1e-5, rtol=1e-5), (q, q_ref)

    print("KERNEL_OK")
</pallas_src>

<mosaic_0001>
module attributes {stable_mosaic.version = 11 : i64} {
  func.func @dueling_head_kernel(%arg0: i32, %arg1: memref<8x16xf32, #tpu.memory_space<vmem>>, %arg2: memref<16x64xf32, #tpu.memory_space<vmem>>, %arg3: memref<1x64xf32, #tpu.memory_space<vmem>>, %arg4: memref<64x128xf32, #tpu.memory_space<vmem>>, %arg5: memref<1x128xf32, #tpu.memory_space<vmem>>, %arg6: memref<128x128xf32, #tpu.memory_space<vmem>>, %arg7: memref<1x128xf32, #tpu.memory_space<vmem>>, %arg8: memref<8x128xf32, #tpu.memory_space<vmem>>) attributes {dimension_semantics = [#tpu.dimension_semantics<parallel>], iteration_bounds = array<i64: 1>, scalar_prefetch = 0 : i64, scratch_operands = 0 : i64, tpu.core_type = #tpu.core_type<tc>, window_params = [{transform_indices = @transform_0, window_bounds = array<i64: 8, 16>}, {pipeline_mode = #tpu.pipeline_mode<synchronous>, transform_indices = @transform_1, window_bounds = array<i64: 16, 64>}, {pipeline_mode = #tpu.pipeline_mode<synchronous>, transform_indices = @transform_2, window_bounds = array<i64: 1, 64>}, {pipeline_mode = #tpu.pipeline_mode<synchronous>, transform_indices = @transform_3, window_bounds = array<i64: 64, 128>}, {pipeline_mode = #tpu.pipeline_mode<synchronous>, transform_indices = @transform_4, window_bounds = array<i64: 1, 128>}, {pipeline_mode = #tpu.pipeline_mode<synchronous>, transform_indices = @transform_5, window_bounds = array<i64: 128, 128>}, {pipeline_mode = #tpu.pipeline_mode<synchronous>, transform_indices = @transform_6, window_bounds = array<i64: 1, 128>}, {transform_indices = @transform_7, window_bounds = array<i64: 8, 128>}]} {
    %c0 = arith.constant 0 : index
    %c0_0 = arith.constant 0 : index
    %0 = vector.load %arg1[%c0, %c0_0] : memref<8x16xf32, #tpu.memory_space<vmem>>, vector<8x16xf32>
    %c0_1 = arith.constant 0 : index
    %c0_2 = arith.constant 0 : index
    %1 = vector.load %arg2[%c0_1, %c0_2] : memref<16x64xf32, #tpu.memory_space<vmem>>, vector<16x64xf32>
    %cst = arith.constant dense<0.000000e+00> : vector<8x64xf32>
    %2 = tpu.matmul %0, %1, %cst {dimension_numbers = #tpu.dot_dimension_numbers<[1], [0], [0], [1], [0, 0, 1, 1], [], []>} : vector<8x16xf32>, vector<16x64xf32>, vector<8x64xf32> -> vector<8x64xf32>
    %c0_3 = arith.constant 0 : index
    %c0_4 = arith.constant 0 : index
    %3 = vector.load %arg3[%c0_3, %c0_4] : memref<1x64xf32, #tpu.memory_space<vmem>>, vector<1x64xf32>
    %4 = vector.broadcast %3 : vector<1x64xf32> to vector<8x64xf32>
    %5 = arith.addf %2, %4 : vector<8x64xf32>
    %cst_5 = arith.constant 0.000000e+00 : f32
    %6 = vector.broadcast %cst_5 : f32 to vector<8x64xf32>
    %7 = arith.maximumf %5, %6 : vector<8x64xf32>
    %c0_6 = arith.constant 0 : index
    %c0_7 = arith.constant 0 : index
    %8 = vector.load %arg4[%c0_6, %c0_7] : memref<64x128xf32, #tpu.memory_space<vmem>>, vector<64x128xf32>
    %cst_8 = arith.constant dense<0.000000e+00> : vector<8x128xf32>
    %9 = tpu.matmul %7, %8, %cst_8 {dimension_numbers = #tpu.dot_dimension_numbers<[1], [0], [0], [1], [0, 0, 1, 1], [], []>} : vector<8x64xf32>, vector<64x128xf32>, vector<8x128xf32> -> vector<8x128xf32>
    %c0_9 = arith.constant 0 : index
    %c0_10 = arith.constant 0 : index
    %10 = vector.load %arg5[%c0_9, %c0_10] : memref<1x128xf32, #tpu.memory_space<vmem>>, vector<1x128xf32>
    %11 = vector.broadcast %10 : vector<1x128xf32> to vector<8x128xf32>
    %12 = arith.addf %9, %11 : vector<8x128xf32>
    %cst_11 = arith.constant 0.000000e+00 : f32
    %13 = vector.broadcast %cst_11 : f32 to vector<8x128xf32>
    %14 = arith.maximumf %12, %13 : vector<8x128xf32>
    %c0_12 = arith.constant 0 : index
    %c0_13 = arith.constant 0 : index
    %15 = vector.load %arg6[%c0_12, %c0_13] : memref<128x128xf32, #tpu.memory_space<vmem>>, vector<128x128xf32>
    %cst_14 = arith.constant dense<0.000000e+00> : vector<8x128xf32>
    %16 = tpu.matmul %14, %15, %cst_14 {dimension_numbers = #tpu.dot_dimension_numbers<[1], [0], [0], [1], [0, 0, 1, 1], [], []>} : vector<8x128xf32>, vector<128x128xf32>, vector<8x128xf32> -> vector<8x128xf32>
    %c0_15 = arith.constant 0 : index
    %c0_16 = arith.constant 0 : index
    %17 = vector.load %arg7[%c0_15, %c0_16] : memref<1x128xf32, #tpu.memory_space<vmem>>, vector<1x128xf32>
    %18 = vector.broadcast %17 : vector<1x128xf32> to vector<8x128xf32>
    %19 = arith.addf %16, %18 : vector<8x128xf32>
    %c0_17 = arith.constant 0 : index
    %c0_18 = arith.constant 0 : index
    %20 = vector.load %arg8[%c0_17, %c0_18] : memref<8x128xf32, #tpu.memory_space<vmem>>, vector<8x128xf32>
    tpu.vector_store %arg8[%c0_17, %c0_18], %19 {strides = array<i32>} : memref<8x128xf32, #tpu.memory_space<vmem>>, vector<8x128xf32>,
    return
  }
  func.func @transform_0(%arg0: i32) -> (i32, i32) {
    %c0_i32 = arith.constant 0 : i32
    %c0_i32_0 = arith.constant 0 : i32
    return %arg0, %c0_i32 : i32, i32
  }
  func.func @transform_1(%arg0: i32) -> (i32, i32) {
    %c0_i32 = arith.constant 0 : i32
    %c0_i32_0 = arith.constant 0 : i32
    %c0_i32_1 = arith.constant 0 : i32
    return %c0_i32, %c0_i32_0 : i32, i32
  }
  func.func @transform_2(%arg0: i32) -> (i32, i32) {
    %c0_i32 = arith.constant 0 : i32
    %c0_i32_0 = arith.constant 0 : i32
    %c0_i32_1 = arith.constant 0 : i32
    return %c0_i32, %c0_i32_0 : i32, i32
  }
  func.func @transform_3(%arg0: i32) -> (i32, i32) {
    %c0_i32 = arith.constant 0 : i32
    %c0_i32_0 = arith.constant 0 : i32
    %c0_i32_1 = arith.constant 0 : i32
    return %c0_i32, %c0_i32_0 : i32, i32
  }
  func.func @transform_4(%arg0: i32) -> (i32, i32) {
    %c0_i32 = arith.constant 0 : i32
    %c0_i32_0 = arith.constant 0 : i32
    %c0_i32_1 = arith.constant 0 : i32
    return %c0_i32, %c0_i32_0 : i32, i32
  }
  func.func @transform_5(%arg0: i32) -> (i32, i32) {
    %c0_i32 = arith.constant 0 : i32
    %c0_i32_0 = arith.constant 0 : i32
    %c0_i32_1 = arith.constant 0 : i32
    return %c0_i32, %c0_i32_0 : i32, i32
  }
  func.func @transform_6(%arg0: i32) -> (i32, i32) {
    %c0_i32 = arith.constant 0 : i32
    %c0_i32_0 = arith.constant 0 : i32
    %c0_i32_1 = arith.constant 0 : i32
    return %c0_i32, %c0_i32_0 : i32, i32
  }
  func.func @transform_7(%arg0: i32) -> (i32, i32) {
    %c0_i32 = arith.constant 0 : i32
    %c0_i32_0 = arith.constant 0 : i32
    return %arg0, %c0_i32 : i32, i32
  }
}

</mosaic_0001>

<llo_original>
// kernel: tpu_custom_call.1
$region0: #{tpu_custom_call.1}
  #allocation0 [shape = 'u32[]', space=smem, size = 0x4, offset = 0x4, fixed_abs, tag = 'smem constant byte address 0x4 - core index']
  #allocation1 [shape = 'u32[144,128]{1,0:T(1,128)}', space=vmem, size = 0x12000, scoped, tag = 'internal scratch']
  %s0 = inlined_call_operand.hbm [shape: f32[8,16], index: 0, kind: input, shape index: {}]
  %s1 = inlined_call_operand.hbm [shape: f32[16,64], index: 1, kind: input, shape index: {}]
  %s2 = inlined_call_operand.vmem [shape: f32[1,64], index: 2, kind: input, shape index: {}]
  %s3 = inlined_call_operand.hbm [shape: f32[64,128], index: 3, kind: input, shape index: {}]
  %s4 = inlined_call_operand.vmem [shape: f32[1,128], index: 4, kind: input, shape index: {}]
  %s5 = inlined_call_operand.hbm [shape: f32[128,128], index: 5, kind: input, shape index: {}]
  %s6 = inlined_call_operand.vmem [shape: f32[1,128], index: 6, kind: input, shape index: {}]
  %s7 = inlined_call_operand.hbm [shape: f32[8,128], index: 7, kind: output, shape index: {}]
  %s8 = sld [smem:[#allocation0]]
  $region54: #{tpu_custom_call.1} parent=0
    _
  %s10 = ssub.s32 1, %s8
  %s11 = scalar_select 0, %s10, %s8
  $region1: #{tpu_custom_call.1} parent=0
    #allocation2 [shape = 'u8[4096]{0}', space=vmem, size = 0x1000, scoped, tag = 'input window, operand 0, single buffered']
    #allocation3 [shape = 's32[1]{0}', space=sflag, size = 0x4, scoped, tag = 'scoped memory for tpu_custom_call.1']
    #allocation4 [shape = 's32[1]{0}', space=sflag, size = 0x4, scoped, tag = 'scoped memory for tpu_custom_call.1']
    #allocation5 [shape = 'u8[8192]{0}', space=vmem, size = 0x2000, scoped, tag = 'input window, operand 1, single buffered']
    #allocation6 [shape = 's32[1]{0}', space=sflag, size = 0x4, scoped, tag = 'scoped memory for tpu_custom_call.1']
    #allocation7 [shape = 'u8[32768]{0}', space=vmem, size = 0x8000, scoped, tag = 'input window, operand 3, single buffered']
    #allocation8 [shape = 'u8[65536]{0}', space=vmem, size = 0x10000, scoped, tag = 'input window, operand 5, single buffered']
    #allocation9 [shape = 's32[1]{0}', space=sflag, size = 0x4, scoped, tag = 'scoped memory for tpu_custom_call.1']
    #allocation10 [shape = 'u8[4096]{0}', space=vmem, size = 0x1000, scoped, tag = 'output window, operand 0, single buffered']
    %12 = vsyncpa [#allocation3], 0
    %13 = vsyncpa [#allocation6], 0
    %14 = vsyncpa [#allocation9], 0
    %15 = vsyncpa [#allocation4], 0
    // Predicated region
    $region2: #{tpu_custom_call.1} parent=1 // pred_check
      _
    $region3: #{tpu_custom_call.1} parent=1 // pred_check_branch
      %17 = sbr.rel (0) target = $region5
    $region4: #{tpu_custom_call.1} parent=1 // pred_region
      %s19 = ssub.s32 128, 128
      %20 = vsyncadd [#allocation3], %s19
      %s22 = sshll.u32 [#allocation2], 4
      %s23 = int_to_ptr.vmem [resolvable:$true] %s22
      %25 = dma.hbm_to_vmem [thread:$0]  %s0, 128, %s23, [#allocation3]
    $region5: #{tpu_custom_call.1} parent=1 // pred_fallthru
      _
    // Predicated region
    $region6: #{tpu_custom_call.1} parent=1 // pred_check
      _
    $region7: #{tpu_custom_call.1} parent=1 // pred_check_branch
      %27 = sbr.rel (0) target = $region9
    $region8: #{tpu_custom_call.1} parent=1 // pred_region
      %s29 = ssub.s32 256, 256
      %30 = vsyncadd [#allocation6], %s29
      %s31 = sshll.u32 [#allocation5], 4
      %s32 = int_to_ptr.vmem [resolvable:$true] %s31
      %37 = dma.hbm_to_vmem [thread:$0]  %s1, 256, %s32, [#allocation6], 128, 128, 8
    $region9: #{tpu_custom_call.1} parent=1 // pred_fallthru
      _
    // Predicated region
    $region10: #{tpu_custom_call.1} parent=1 // pred_check
      _
    $region11: #{tpu_custom_call.1} parent=1 // pred_check_branch
      %39 = sbr.rel (0) target = $region13
    $region12: #{tpu_custom_call.1} parent=1 // pred_region
      _
    $region13: #{tpu_custom_call.1} parent=1 // pred_fallthru
      _
    // Predicated region
    $region14: #{tpu_custom_call.1} parent=1 // pred_check
      _
    $region15: #{tpu_custom_call.1} parent=1 // pred_check_branch
      %41 = sbr.rel (0) target = $region17
    $region16: #{tpu_custom_call.1} parent=1 // pred_region
      %s43 = ssub.s32 1024, 1024
      %44 = vsyncadd [#allocation6], %s43
      %s45 = sshll.u32 [#allocation7], 4
      %s46 = int_to_ptr.vmem [resolvable:$true] %s45
      %51 = dma.hbm_to_vmem [thread:$0]  %s3, 1024, %s46, [#allocation6], 128, 128, 8
    $region17: #{tpu_custom_call.1} parent=1 // pred_fallthru
      _
    // Predicated region
    $region18: #{tpu_custom_call.1} parent=1 // pred_check
      _
    $region19: #{tpu_custom_call.1} parent=1 // pred_check_branch
      %53 = sbr.rel (0) target = $region21
    $region20: #{tpu_custom_call.1} parent=1 // pred_region
      _
    $region21: #{tpu_custom_call.1} parent=1 // pred_fallthru
      _
    // Predicated region
    $region22: #{tpu_custom_call.1} parent=1 // pred_check
      _
    $region23: #{tpu_custom_call.1} parent=1 // pred_check_branch
      %55 = sbr.rel (0) target = $region25
    $region24: #{tpu_custom_call.1} parent=1 // pred_region
      %s57 = ssub.s32 2048, 2048
      %58 = vsyncadd [#allocation9], %s57
      %s59 = sshll.u32 [#allocation8], 4
      %s60 = int_to_ptr.vmem [resolvable:$true] %s59
      %65 = dma.hbm_to_vmem [thread:$0]  %s5, 2048, %s60, [#allocation9], 128, 128, 8
    $region25: #{tpu_custom_call.1} parent=1 // pred_fallthru
      _
    // Predicated region
    $region26: #{tpu_custom_call.1} parent=1 // pred_check
      _
    $region27: #{tpu_custom_call.1} parent=1 // pred_check_branch
      %67 = sbr.rel (0) target = $region29
    $region28: #{tpu_custom_call.1} parent=1 // pred_region
      _
    $region29: #{tpu_custom_call.1} parent=1 // pred_fallthru
      _
    // Predicated region
    $region30: #{tpu_custom_call.1} parent=1 // pred_check
      _
    $region31: #{tpu_custom_call.1} parent=1 // pred_check_branch
      %69 = sbr.rel (0) target = $region33
    $region32: #{tpu_custom_call.1} parent=1 // pred_region
      %70 = dma.done [#allocation3], 128
    $region33: #{tpu_custom_call.1} parent=1 // pred_fallthru
      _
    // Predicated region
    $region34: #{tpu_custom_call.1} parent=1 // pred_check
      _
    $region35: #{tpu_custom_call.1} parent=1 // pred_check_branch
      %72 = sbr.rel (0) target = $region37
    $region36: #{tpu_custom_call.1} parent=1 // pred_region
      %73 = dma.done [#allocation6], 256
    $region37: #{tpu_custom_call.1} parent=1 // pred_fallthru
      _
    // Predicated region
    $region38: #{tpu_custom_call.1} parent=1 // pred_check
      _
    $region39: #{tpu_custom_call.1} parent=1 // pred_check_branch
      %75 = sbr.rel (0) target = $region41
    $region40: #{tpu_custom_call.1} parent=1 // pred_region
      %76 = dma.done [#allocation6], 1024
    $region41: #{tpu_custom_call.1} parent=1 // pred_fallthru
      _
    // Predicated region
    $region42: #{tpu_custom_call.1} parent=1 // pred_check
      _
    $region43: #{tpu_custom_call.1} parent=1 // pred_check_branch
      %78 = sbr.rel (0) target = $region45
    $region44: #{tpu_custom_call.1} parent=1 // pred_region
      %79 = dma.done [#allocation9], 2048
    $region45: #{tpu_custom_call.1} parent=1 // pred_fallthru
      _
    %v80 = vld [vmem:[#allocation2] sm:$0xff]
    %v81 = vld [vmem:[#allocation5] sm:$0xff]
    %v82 = vld [vmem:[#allocation5 + $0x8] sm:$0xff]
    %v83 = vld [vmem:[%s2] sm:$0x1]
    %v85 = vlaneseq
    %v86 = vshrl.u32 %v85, 7
    %v87 = vsub.s32 0, %v86
    %v88 = vrot.slane %v83, %v87
    %vm90 = vcmask 130048
    %v92 = vsel %vm90, %v80, 0
    %94 = vmatprep.subr.mxu0 0.0
    %95 = vmatpush1.msra.mxu0 %v81
    %96 = vmatprep.subr.mxu0 0.0
    %97 = vmatpush1.msra.mxu0 %v82
    %98 = vmatprep.subr.mxu0 0.0
    %99 = vmatpush1.msra.mxu0 0.0
    %100 = vmatprep.subr.mxu0 0.0
    %101 = vmatpush1.msra.mxu0 0.0
    %102 = vmatprep.subr.mxu0 0.0
    %103 = vmatpush1.msra.mxu0 0.0
    %104 = vmatprep.subr.mxu0 0.0
    %105 = vmatpush1.msra.mxu0 0.0
    %106 = vmatprep.subr.mxu0 0.0
    %107 = vmatpush1.msra.mxu0 0.0
    %108 = vmatprep.subr.mxu0 0.0
    %109 = vmatpush1.msra.mxu0 0.0
    %110 = vmatprep.subr.mxu0 0.0
    %111 = vmatpush1.msra.mxu0 0.0
    %112 = vmatprep.subr.mxu0 0.0
    %113 = vmatpush1.msra.mxu0 0.0
    %114 = vmatprep.subr.mxu0 0.0
    %115 = vmatpush1.msra.mxu0 0.0
    %116 = vmatprep.subr.mxu0 0.0
    %117 = vmatpush1.msra.mxu0 0.0
    %118 = vmatprep.subr.mxu0 0.0
    %119 = vmatpush1.msra.mxu0 0.0
    %120 = vmatprep.subr.mxu0 0.0
    %121 = vmatpush1.msra.mxu0 0.0
    %122 = vmatprep.subr.mxu0 0.0
    %123 = vmatpush1.msra.mxu0 0.0
    %124 = vmatprep.subr.mxu0 0.0
    %125 = vmatpush1.msra.mxu0 0.0
    %126 = vmatprep.subr.mxu0 0.0
    %127 = vmatpush1.msra.mxu0 0.0
    %128 = vmatprep.subr.mxu0 0.0
    %129 = vmatpush1.msra.mxu0 0.0
    %130 = vmatprep.subr.mxu0 0.0
    %131 = vmatpush1.msra.mxu0 0.0
    %132 = vmatprep.subr.mxu0 0.0
    %133 = vmatpush1.msra.mxu0 0.0
    %134 = vmatprep.subr.mxu0 0.0
    %135 = vmatpush1.msra.mxu0 0.0
    %136 = vmatprep.subr.mxu0 0.0
    %137 = vmatpush1.msra.mxu0 0.0
    %138 = vmatprep.subr.mxu0 0.0
    %139 = vmatpush1.msra.mxu0 0.0
    %140 = vmatprep.subr.mxu0 0.0
    %141 = vmatpush1.msra.mxu0 0.0
    %142 = vmatprep.subr.mxu0 0.0
    %143 = vmatpush1.msra.mxu0 0.0
    %144 = vmatprep.subr.mxu0 0.0
    %145 = vmatpush1.msra.mxu0 0.0
    %146 = vmatprep.subr.mxu0 0.0
    %147 = vmatpush1.msra.mxu0 0.0
    %148 = vmatprep.subr.mxu0 0.0
    %149 = vmatpush1.msra.mxu0 0.0
    %150 = vmatprep.subr.mxu0 0.0
    %151 = vmatpush1.msra.mxu0 0.0
    %152 = vmatprep.subr.mxu0 0.0
    %153 = vmatpush1.msra.mxu0 0.0
    %154 = vmatprep.subr.mxu0 0.0
    %155 = vmatpush1.msra.mxu0 0.0
    %156 = vmatprep.subr.mxu0 0.0
    %157 = vmatpush1.msra.mxu0 0.0
    %158 = vmatprep.mubr.f32.mxu0 0.0
    %159 = vmatmul.mubr.f32.gmra.mrb[0].mxu0 %v92
    %v160 = vpop.f32.mrb[0].mxu0
    %v161 = vadd.f32 %v88, %v160
    %v162 = vpop.f32.mrb[0].mxu0
    %163 = vdwg.mxu0
    %v164 = vmax.f32 %v161, 0.0
    %v165 = vld [vmem:[#allocation7] sm:$0xff]
    %v166 = vld [vmem:[#allocation7 + $0x8] sm:$0xff]
    %v167 = vld [vmem:[#allocation7 + $0x10] sm:$0xff]
    %v168 = vld [vmem:[#allocation7 + $0x18] sm:$0xff]
    %v169 = vld [vmem:[#allocation7 + $0x20] sm:$0xff]
    %v170 = vld [vmem:[#allocation7 + $0x28] sm:$0xff]
    %v171 = vld [vmem:[#allocation7 + $0x30] sm:$0xff]
    %v172 = vld [vmem:[#allocation7 + $0x38] sm:$0xff]
    %v173 = vld [vmem:[%s4] sm:$0x1]
    %v175 = vlaneseq
    %v176 = vshrl.u32 %v175, 7
    %v177 = vsub.s32 0, %v176
    %v178 = vrot.slane %v173, %v177
    %vm180 = vcmask 523264
    %v182 = vsel %vm180, %v164, 0
    %184 = vmatprep.subr.mxu0 0.0
    %185 = vmatpush1.msra.mxu0 %v165
    %186 = vmatprep.subr.mxu0 0.0
    %187 = vmatpush1.msra.mxu0 %v166
    %188 = vmatprep.subr.mxu0 0.0
    %189 = vmatpush1.msra.mxu0 %v167
    %190 = vmatprep.subr.mxu0 0.0
    %191 = vmatpush1.msra.mxu0 %v168
    %192 = vmatprep.subr.mxu0 0.0
    %193 = vmatpush1.msra.mxu0 %v169
    %194 = vmatprep.subr.mxu0 0.0
    %195 = vmatpush1.msra.mxu0 %v170
    %196 = vmatprep.subr.mxu0 0.0
    %197 = vmatpush1.msra.mxu0 %v171
    %198 = vmatprep.subr.mxu0 0.0
    %199 = vmatpush1.msra.mxu0 %v172
    %200 = vmatprep.subr.mxu0 0.0
    %201 = vmatpush1.msra.mxu0 0.0
    %202 = vmatprep.subr.mxu0 0.0
    %203 = vmatpush1.msra.mxu0 0.0
    %204 = vmatprep.subr.mxu0 0.0
    %205 = vmatpush1.msra.mxu0 0.0
    %206 = vmatprep.subr.mxu0 0.0
    %207 = vmatpush1.msra.mxu0 0.0
    %208 = vmatprep.subr.mxu0 0.0
    %209 = vmatpush1.msra.mxu0 0.0
    %210 = vmatprep.subr.mxu0 0.0
    %211 = vmatpush1.msra.mxu0 0.0
    %212 = vmatprep.subr.mxu0 0.0
    %213 = vmatpush1.msra.mxu0 0.0
    %214 = vmatprep.subr.mxu0 0.0
    %215 = vmatpush1.msra.mxu0 0.0
    %216 = vmatprep.subr.mxu0 0.0
    %217 = vmatpush1.msra.mxu0 0.0
    %218 = vmatprep.subr.mxu0 0.0
    %219 = vmatpush1.msra.mxu0 0.0
    %220 = vmatprep.subr.mxu0 0.0
    %221 = vmatpush1.msra.mxu0 0.0
    %222 = vmatprep.subr.mxu0 0.0
    %223 = vmatpush1.msra.mxu0 0.0
    %224 = vmatprep.subr.mxu0 0.0
    %225 = vmatpush1.msra.mxu0 0.0
    %226 = vmatprep.subr.mxu0 0.0
    %227 = vmatpush1.msra.mxu0 0.0
    %228 = vmatprep.subr.mxu0 0.0
    %229 = vmatpush1.msra.mxu0 0.0
    %230 = vmatprep.subr.mxu0 0.0
    %231 = vmatpush1.msra.mxu0 0.0
    %232 = vmatprep.subr.mxu0 0.0
    %233 = vmatpush1.msra.mxu0 0.0
    %234 = vmatprep.subr.mxu0 0.0
    %235 = vmatpush1.msra.mxu0 0.0
    %236 = vmatprep.subr.mxu0 0.0
    %237 = vmatpush1.msra.mxu0 0.0
    %238 = vmatprep.subr.mxu0 0.0
    %239 = vmatpush1.msra.mxu0 0.0
    %240 = vmatprep.subr.mxu0 0.0
    %241 = vmatpush1.msra.mxu0 0.0
    %242 = vmatprep.subr.mxu0 0.0
    %243 = vmatpush1.msra.mxu0 0.0
    %244 = vmatprep.subr.mxu0 0.0
    %245 = vmatpush1.msra.mxu0 0.0
    %246 = vmatprep.subr.mxu0 0.0
    %247 = vmatpush1.msra.mxu0 0.0
    %248 = vmatprep.mubr.f32.mxu0 0.0
    %249 = vmatmul.mubr.f32.gmra.mrb[0].mxu0 %v182
    %v250 = vpop.f32.mrb[0].mxu0
    %v251 = vadd.f32 %v178, %v250
    %v252 = vpop.f32.mrb[0].mxu0
    %253 = vdwg.mxu0
    %v254 = vmax.f32 %v251, 0.0
    %v255 = vld [vmem:[#allocation8] sm:$0xff]
    %v256 = vld [vmem:[#allocation8 + $0x8] sm:$0xff]
    %v257 = vld [vmem:[#allocation8 + $0x10] sm:$0xff]
    %v258 = vld [vmem:[#allocation8 + $0x18] sm:$0xff]
    %v259 = vld [vmem:[#allocation8 + $0x20] sm:$0xff]
    %v260 = vld [vmem:[#allocation8 + $0x28] sm:$0xff]
    %v261 = vld [vmem:[#allocation8 + $0x30] sm:$0xff]
    %v262 = vld [vmem:[#allocation8 + $0x38] sm:$0xff]
    %v263 = vld [vmem:[#allocation8 + $0x40] sm:$0xff]
    %v264 = vld [vmem:[#allocation8 + $0x48] sm:$0xff]
    %v265 = vld [vmem:[#allocation8 + $0x50] sm:$0xff]
    %v266 = vld [vmem:[#allocation8 + $0x58] sm:$0xff]
    %v267 = vld [vmem:[#allocation8 + $0x60] sm:$0xff]
    %v268 = vld [vmem:[#allocation8 + $0x68] sm:$0xff]
    %v269 = vld [vmem:[#allocation8 + $0x70] sm:$0xff]
    %v270 = vld [vmem:[#allocation8 + $0x78] sm:$0xff]
    %v271 = vld [vmem:[%s6] sm:$0x1]
    %v273 = vlaneseq
    %v274 = vshrl.u32 %v273, 7
    %v275 = vsub.s32 0, %v274
    %v276 = vrot.slane %v271, %v275
    %278 = vmatprep.subr.mxu0 0.0
    %279 = vmatpush1.msra.mxu0 %v255
    %280 = vmatprep.subr.mxu0 0.0
    %281 = vmatpush1.msra.mxu0 %v256
    %282 = vmatprep.subr.mxu0 0.0
    %283 = vmatpush1.msra.mxu0 %v257
    %284 = vmatprep.subr.mxu0 0.0
    %285 = vmatpush1.msra.mxu0 %v258
    %286 = vmatprep.subr.mxu0 0.0
    %287 = vmatpush1.msra.mxu0 %v259
    %288 = vmatprep.subr.mxu0 0.0
    %289 = vmatpush1.msra.mxu0 %v260
    %290 = vmatprep.subr.mxu0 0.0
    %291 = vmatpush1.msra.mxu0 %v261
    %292 = vmatprep.subr.mxu0 0.0
    %293 = vmatpush1.msra.mxu0 %v262
    %294 = vmatprep.subr.mxu0 0.0
    %295 = vmatpush1.msra.mxu0 %v263
    %296 = vmatprep.subr.mxu0 0.0
    %297 = vmatpush1.msra.mxu0 %v264
    %298 = vmatprep.subr.mxu0 0.0
    %299 = vmatpush1.msra.mxu0 %v265
    %300 = vmatprep.subr.mxu0 0.0
    %301 = vmatpush1.msra.mxu0 %v266
    %302 = vmatprep.subr.mxu0 0.0
    %303 = vmatpush1.msra.mxu0 %v267
    %304 = vmatprep.subr.mxu0 0.0
    %305 = vmatpush1.msra.mxu0 %v268
    %306 = vmatprep.subr.mxu0 0.0
    %307 = vmatpush1.msra.mxu0 %v269
    %308 = vmatprep.subr.mxu0 0.0
    %309 = vmatpush1.msra.mxu0 %v270
    %310 = vmatprep.subr.mxu0 0.0
    %311 = vmatpush1.msra.mxu0 0.0
    %312 = vmatprep.subr.mxu0 0.0
    %313 = vmatpush1.msra.mxu0 0.0
    %314 = vmatprep.subr.mxu0 0.0
    %315 = vmatpush1.msra.mxu0 0.0
    %316 = vmatprep.subr.mxu0 0.0
    %317 = vmatpush1.msra.mxu0 0.0
    %318 = vmatprep.subr.mxu0 0.0
    %319 = vmatpush1.msra.mxu0 0.0
    %320 = vmatprep.subr.mxu0 0.0
    %321 = vmatpush1.msra.mxu0 0.0
    %322 = vmatprep.subr.mxu0 0.0
    %323 = vmatpush1.msra.mxu0 0.0
    %324 = vmatprep.subr.mxu0 0.0
    %325 = vmatpush1.msra.mxu0 0.0
    %326 = vmatprep.subr.mxu0 0.0
    %327 = vmatpush1.msra.mxu0 0.0
    %328 = vmatprep.subr.mxu0 0.0
    %329 = vmatpush1.msra.mxu0 0.0
    %330 = vmatprep.subr.mxu0 0.0
    %331 = vmatpush1.msra.mxu0 0.0
    %332 = vmatprep.subr.mxu0 0.0
    %333 = vmatpush1.msra.mxu0 0.0
    %334 = vmatprep.subr.mxu0 0.0
    %335 = vmatpush1.msra.mxu0 0.0
    %336 = vmatprep.subr.mxu0 0.0
    %337 = vmatpush1.msra.mxu0 0.0
    %338 = vmatprep.subr.mxu0 0.0
    %339 = vmatpush1.msra.mxu0 0.0
    %340 = vmatprep.subr.mxu0 0.0
    %341 = vmatpush1.msra.mxu0 0.0
    %342 = vmatprep.mubr.f32.mxu0 0.0
    %343 = vmatmul.mubr.f32.gmra.mrb[0].mxu0 %v254
    %v344 = vpop.f32.mrb[0].mxu0
    %v345 = vadd.f32 %v276, %v344
    %v346 = vpop.f32.mrb[0].mxu0
    %347 = vdwg.mxu0
    %348 = vst [vmem:[#allocation10] sm:$0xff] %v345
    // Predicated region
    $region46: #{tpu_custom_call.1} parent=1 // pred_check
      _
    $region47: #{tpu_custom_call.1} parent=1 // pred_check_branch
      %350 = sbr.rel (0) target = $region49
    $region48: #{tpu_custom_call.1} parent=1 // pred_region
      %s352 = ssub.s32 128, 128
      %353 = vsyncadd [#allocation4], %s352
      %s355 = sshll.u32 [#allocation10], 4
      %s356 = int_to_ptr.vmem [resolvable:$true] %s355
      %358 = dma.vmem_to_hbm [thread:$0]  %s356, 128, %s7, [#allocation4]
    $region49: #{tpu_custom_call.1} parent=1 // pred_fallthru
      _
    // Predicated region
    $region50: #{tpu_custom_call.1} parent=1 // pred_check
      _
    $region51: #{tpu_custom_call.1} parent=1 // pred_check_branch
      %360 = sbr.rel (0) target = $region53
    $region52: #{tpu_custom_call.1} parent=1 // pred_region
      %361 = dma.done [#allocation4], 128
    $region53: #{tpu_custom_call.1} parent=1 // pred_fallthru
      _
    %362 = vsyncpa [#allocation3], 1
    %363 = vsyncpa [#allocation6], 1
    %364 = vsyncpa [#allocation9], 1
    %365 = vsyncpa [#allocation4], 1

</llo_original>
